<compile_context>
chip_gen: v6e
topology: v6e:2x2x1
jax: 0.10.0
libtpu: 0.0.40
codegen_flags: <defaults>
</compile_context>

<pallas_src>
import functools

import jax
import jax.numpy as jnp
from jax.experimental import pallas as pl
from jax.experimental.pallas import tpu as pltpu

_LANES = 128


def _gap_head_kernel(x_ref, w_ref, b_ref, o_ref, acc_ref, *, inv_hw):
    """Grid: (batch_tiles, spatial_tiles). Spatial axis is the reduction."""
    s = pl.program_id(1)

    @pl.when(s == 0)
    def _():
        acc_ref[...] = jnp.zeros_like(acc_ref)

    # [b_tile, C, hw_tile] block.  Accumulate 128-lane-aligned static slices
    # with plain VPU adds; the cross-lane reduce is deferred to the epilogue
    # so the inner loop is pure vld + vadd (no per-step XLU relayout).
    xb = x_ref[...].astype(jnp.float32)
    hw_tile = xb.shape[-1]
    partial = xb[..., 0:_LANES]
    for k in range(1, hw_tile // _LANES):
        partial = partial + xb[..., k * _LANES:(k + 1) * _LANES]
    acc_ref[...] += partial

    # Epilogue: one lane reduce + tiny classifier matmul per batch tile.
    @pl.when(s == pl.num_programs(1) - 1)
    def _():
        feat = jnp.sum(acc_ref[...], axis=-1) * inv_hw            # [b_tile, C]
        logits = jnp.dot(feat, w_ref[...],
                         preferred_element_type=jnp.float32) + b_ref[...]
        o_ref[...] = logits[None].astype(o_ref.dtype)             # [1, b_tile, NCLSp]


def _pick_hw_tile(hw, max_hw_tile):
    """Largest multiple of 128 that divides hw and is <= max_hw_tile."""
    t = (min(hw, max_hw_tile) // _LANES) * _LANES
    while t > _LANES and hw % t != 0:
        t -= _LANES
    return max(t, _LANES)


def _pick_b_tile(batch, c, hw_tile, itemsize, max_in_block_bytes):
    """Divisor of batch giving >=2 batch tiles (v7x megacore) within VMEM budget."""
    b_tile = batch // 2 if batch >= 2 else batch
    while b_tile > 1 and batch % b_tile != 0:
        b_tile -= 1
    b_tile = max(b_tile, 1)
    while b_tile > 1 and b_tile * c * hw_tile * itemsize > max_in_block_bytes:
        b_tile -= 1
        while b_tile > 1 and batch % b_tile != 0:
            b_tile -= 1
    return max(b_tile, 1)


def net2_forward(x, params, *, hw_tile=None, b_tile=None, buffer_count=2,
                 max_hw_tile=4096, max_in_block_bytes=12 << 20):
    """x: [B, C, H, W] float32/bfloat16 (NCHW). Returns [B, NCLS] float32 logits."""
    B, C, H, W = x.shape
    HW = H * W
    assert HW % _LANES == 0, "spatial extent H*W must be a multiple of 128"

    itemsize = jnp.dtype(x.dtype).itemsize
    if hw_tile is None:
        hw_tile = _pick_hw_tile(HW, max_hw_tile)
    assert HW % hw_tile == 0 and hw_tile % _LANES == 0
    if b_tile is None:
        b_tile = _pick_b_tile(B, C, hw_tile, itemsize, max_in_block_bytes)
    assert B % b_tile == 0
    n_btiles = B // b_tile

    # Lane-dense spatial axis: free wrapper reshape, full-vreg loads in-kernel.
    x_flat = x.reshape(B, C, HW)

    # Pad the classifier head to a multiple of 128 lanes (unmasked vst for the
    # logits store); slice the padding back off in the wrapper.
    w = params["head_w"].astype(jnp.float32)
    bvec = params["head_b"].astype(jnp.float32)
    ncls = w.shape[1]
    ncls_pad = ((ncls + _LANES - 1) // _LANES) * _LANES
    if ncls_pad != ncls:
        w = jnp.pad(w, ((0, 0), (0, ncls_pad - ncls)))
        bvec = jnp.pad(bvec, ((0, ncls_pad - ncls),))
    bias = bvec.reshape(1, ncls_pad)

    grid = (n_btiles, HW // hw_tile)
    kernel = functools.partial(_gap_head_kernel, inv_hw=1.0 / HW)

    # Input tiles stream through VMEM; default 2-deep double buffering, deeper
    # pipelining (e.g. Buffered(3) on v7x/v6e) available as a sweep knob.
    if buffer_count == 2:
        x_spec = pl.BlockSpec((b_tile, C, hw_tile), lambda b, s: (b, 0, s))
    else:
        x_spec = pl.BlockSpec((b_tile, C, hw_tile), lambda b, s: (b, 0, s),
                              pipeline_mode=pl.Buffered(buffer_count))

    # Explicit scoped-VMEM limit: enough for the multi-buffered input blocks,
    # resident head, accumulator and output, capped well under v7x's 64 MiB.
    in_block_bytes = b_tile * C * hw_tile * itemsize
    head_bytes = (C * ncls_pad + ncls_pad) * 4
    out_bytes = b_tile * ncls_pad * 4
    acc_bytes = b_tile * C * _LANES * 4
    needed = (max(buffer_count, 2) * in_block_bytes
              + 2 * (head_bytes + out_bytes) + acc_bytes)
    vmem_limit = int(min(max(2 * needed, 32 << 20), 56 << 20))

    out = pl.pallas_call(
        kernel,
        # 3-D output (batch tiles, b_tile, NCLSp) keeps the per-tile output
        # block's trailing two dims equal to the full array dims (layout-clean).
        out_shape=jax.ShapeDtypeStruct((n_btiles, b_tile, ncls_pad), jnp.float32),
        grid_spec=pltpu.PrefetchScalarGridSpec(
            num_scalar_prefetch=0,
            grid=grid,
            in_specs=[
                x_spec,
                # Head weight / bias stay VMEM-resident (constant block index).
                pl.BlockSpec((C, ncls_pad), lambda b, s: (0, 0)),
                pl.BlockSpec((1, ncls_pad), lambda b, s: (0, 0)),
            ],
            out_specs=pl.BlockSpec((1, b_tile, ncls_pad), lambda b, s: (b, 0, 0)),
            scratch_shapes=[pltpu.VMEM((b_tile, C, _LANES), jnp.float32)],
        ),
        compiler_params=pltpu.CompilerParams(
            dimension_semantics=("parallel", "arbitrary"),
            vmem_limit_bytes=vmem_limit,
        ),
    )(x_flat, w, bias)

    out = out.reshape(B, ncls_pad)
    return out[:, :ncls] if ncls_pad != ncls else out


def reference_forward(x, params):
    """Pure-JAX reference with identical stand-in semantics."""
    feat = jnp.mean(x.astype(jnp.float32), axis=(2, 3))
    return feat @ params["head_w"] + params["head_b"]


if __name__ == "__main__":
    # Scaled-down shapes consistent with the module:
    #   in_chans 40 -> 4, image 448x448 -> 16x16,
    #   num_classes 1000 -> 128 (multiple of 128 for a lane-dense output).
    B, C, H, W = 2, 4, 16, 16
    NCLS = 128

    key = jax.random.PRNGKey(0)
    kx, kw, kb = jax.random.split(key, 3)

    params = {
        "head_w": 0.05 * jax.random.normal(kw, (C, NCLS), dtype=jnp.float32),
        "head_b": 0.05 * jax.random.normal(kb, (NCLS,), dtype=jnp.float32),
    }
    x = jax.random.normal(kx, (B, C, H, W), dtype=jnp.float32)

    out = jax.block_until_ready(net2_forward(x, params))
    ref = reference_forward(x, params)

    assert out.shape == (B, NCLS), out.shape
    max_err = float(jnp.max(jnp.abs(out - ref)))
    assert jnp.allclose(out, ref, atol=1e-4, rtol=1e-4), max_err
    print("KERNEL_OK")
</pallas_src>

<mosaic_0001>
module attributes {stable_mosaic.version = 11 : i64} {
  func.func @_gap_head_kernel(%arg0: i32, %arg1: i32, %arg2: memref<1x4x256xf32, #tpu.memory_space<vmem>>, %arg3: memref<4x128xf32, #tpu.memory_space<vmem>>, %arg4: memref<1x128xf32, #tpu.memory_space<vmem>>, %arg5: memref<1x1x128xf32, #tpu.memory_space<vmem>>, %arg6: memref<1x4x128xf32, #tpu.memory_space<vmem>>) attributes {dimension_semantics = [#tpu.dimension_semantics<parallel>, #tpu.dimension_semantics<arbitrary>], iteration_bounds = array<i64: 2, 1>, scalar_prefetch = 0 : i64, scratch_operands = 1 : i64, tpu.core_type = #tpu.core_type<tc>, window_params = [{transform_indices = @transform_0, window_bounds = array<i64: 1, 4, 256>}, {pipeline_mode = #tpu.pipeline_mode<synchronous>, transform_indices = @transform_1, window_bounds = array<i64: 4, 128>}, {pipeline_mode = #tpu.pipeline_mode<synchronous>, transform_indices = @transform_2, window_bounds = array<i64: 1, 128>}, {transform_indices = @transform_3, window_bounds = array<i64: 1, 1, 128>}]} {
    %c0_i32 = arith.constant 0 : i32
    %0 = arith.cmpi eq, %arg1, %c0_i32 : i32
    %1 = arith.extui %0 : i1 to i32
    %c0_i32_0 = arith.constant 0 : i32
    %2 = arith.cmpi ne, %1, %c0_i32_0 : i32
    scf.if %2 {
      %cst = arith.constant 0.000000e+00 : f32
      %13 = vector.broadcast %cst : f32 to vector<1x4x128xf32>
      %c0_11 = arith.constant 0 : index
      %c0_12 = arith.constant 0 : index
      %c0_13 = arith.constant 0 : index
      %14 = vector.load %arg6[%c0_11, %c0_12, %c0_13] : memref<1x4x128xf32, #tpu.memory_space<vmem>>, vector<1x4x128xf32>
      tpu.vector_store %arg6[%c0_11, %c0_12, %c0_13], %13 {strides = array<i32>} : memref<1x4x128xf32, #tpu.memory_space<vmem>>, vector<1x4x128xf32>,
    } else {
    }
    %c0 = arith.constant 0 : index
    %c0_1 = arith.constant 0 : index
    %c0_2 = arith.constant 0 : index
    %3 = vector.load %arg2[%c0, %c0_1, %c0_2] : memref<1x4x256xf32, #tpu.memory_space<vmem>>, vector<1x4x256xf32>
    %4 = vector.extract_strided_slice %3 {offsets = [0, 0, 0], sizes = [1, 4, 128], strides = [1, 1, 1]} : vector<1x4x256xf32> to vector<1x4x128xf32>
    %5 = vector.extract_strided_slice %3 {offsets = [0, 0, 128], sizes = [1, 4, 128], strides = [1, 1, 1]} : vector<1x4x256xf32> to vector<1x4x128xf32>
    %6 = arith.addf %4, %5 : vector<1x4x128xf32>
    %c0_3 = arith.constant 0 : index
    %c0_4 = arith.constant 0 : index
    %c0_5 = arith.constant 0 : index
    %7 = vector.load %arg6[%c0_3, %c0_4, %c0_5] : memref<1x4x128xf32, #tpu.memory_space<vmem>>, vector<1x4x128xf32>
    %8 = arith.addf %7, %6 : vector<1x4x128xf32>
    %c0_6 = arith.constant 0 : index
    %c0_7 = arith.constant 0 : index
    %c0_8 = arith.constant 0 : index
    %9 = vector.load %arg6[%c0_6, %c0_7, %c0_8] : memref<1x4x128xf32, #tpu.memory_space<vmem>>, vector<1x4x128xf32>
    tpu.vector_store %arg6[%c0_6, %c0_7, %c0_8], %8 {strides = array<i32>} : memref<1x4x128xf32, #tpu.memory_space<vmem>>, vector<1x4x128xf32>,
    %c0_i32_9 = arith.constant 0 : i32
    %10 = arith.cmpi eq, %arg1, %c0_i32_9 : i32
    %11 = arith.extui %10 : i1 to i32
    %c0_i32_10 = arith.constant 0 : i32
    %12 = arith.cmpi ne, %11, %c0_i32_10 : i32
    scf.if %12 {
      %c0_11 = arith.constant 0 : index
      %c0_12 = arith.constant 0 : index
      %c0_13 = arith.constant 0 : index
      %13 = vector.load %arg6[%c0_11, %c0_12, %c0_13] : memref<1x4x128xf32, #tpu.memory_space<vmem>>, vector<1x4x128xf32>
      %cst = arith.constant dense<0.000000e+00> : vector<1x4xf32>
      %14 = vector.multi_reduction <add>, %13, %cst [2] : vector<1x4x128xf32> to vector<1x4xf32>
      %cst_14 = arith.constant 3.906250e-03 : f32
      %15 = vector.broadcast %cst_14 : f32 to vector<1x4xf32>
      %16 = arith.mulf %14, %15 : vector<1x4xf32>
      %c0_15 = arith.constant 0 : index
      %c0_16 = arith.constant 0 : index
      %17 = vector.load %arg3[%c0_15, %c0_16] : memref<4x128xf32, #tpu.memory_space<vmem>>, vector<4x128xf32>
      %cst_17 = arith.constant dense<0.000000e+00> : vector<1x128xf32>
      %18 = tpu.matmul %16, %17, %cst_17 {dimension_numbers = #tpu.dot_dimension_numbers<[1], [0], [0], [1], [0, 0, 1, 1], [], []>} : vector<1x4xf32>, vector<4x128xf32>, vector<1x128xf32> -> vector<1x128xf32>
      %c0_18 = arith.constant 0 : index
      %c0_19 = arith.constant 0 : index
      %19 = vector.load %arg4[%c0_18, %c0_19] : memref<1x128xf32, #tpu.memory_space<vmem>>, vector<1x128xf32>
      %20 = arith.addf %18, %19 : vector<1x128xf32>
      %21 = vector.shape_cast %20 : vector<1x128xf32> to vector<1x1x128xf32>
      %c0_20 = arith.constant 0 : index
      %c0_21 = arith.constant 0 : index
      %c0_22 = arith.constant 0 : index
      %22 = vector.load %arg5[%c0_20, %c0_21, %c0_22] : memref<1x1x128xf32, #tpu.memory_space<vmem>>, vector<1x1x128xf32>
      tpu.vector_store %arg5[%c0_20, %c0_21, %c0_22], %21 {strides = array<i32>} : memref<1x1x128xf32, #tpu.memory_space<vmem>>, vector<1x1x128xf32>,
    } else {
    }
    return
  }
  func.func @transform_0(%arg0: i32, %arg1: i32) -> (i32, i32, i32) {
    %c0_i32 = arith.constant 0 : i32
    %c0_i32_0 = arith.constant 0 : i32
    return %arg0, %c0_i32, %arg1 : i32, i32, i32
  }
  func.func @transform_1(%arg0: i32, %arg1: i32) -> (i32, i32) {
    %c0_i32 = arith.constant 0 : i32
    %c0_i32_0 = arith.constant 0 : i32
    %c0_i32_1 = arith.constant 0 : i32
    return %c0_i32, %c0_i32_0 : i32, i32
  }
  func.func @transform_2(%arg0: i32, %arg1: i32) -> (i32, i32) {
    %c0_i32 = arith.constant 0 : i32
    %c0_i32_0 = arith.constant 0 : i32
    %c0_i32_1 = arith.constant 0 : i32
    return %c0_i32, %c0_i32_0 : i32, i32
  }
  func.func @transform_3(%arg0: i32, %arg1: i32) -> (i32, i32, i32) {
    %c0_i32 = arith.constant 0 : i32
    %c0_i32_0 = arith.constant 0 : i32
    %c0_i32_1 = arith.constant 0 : i32
    return %arg0, %c0_i32, %c0_i32_0 : i32, i32, i32
  }
}

</mosaic_0001>

<llo_original>
// kernel: tpu_custom_call.1
$region0: #{tpu_custom_call.1}
  #allocation0 [shape = 'u32[]', space=smem, size = 0x4, offset = 0x4, fixed_abs, tag = 'smem constant byte address 0x4 - core index']
  #allocation1 [shape = 'u32[144,128]{1,0:T(1,128)}', space=vmem, size = 0x12000, scoped, tag = 'internal scratch']
  #allocation2 [shape = 'f32[1,4,128]{2,1,0:T(4,128)}', space=vmem, size = 0x800, scoped, tag = 'scratch operand']
  %s0 = inlined_call_operand.hbm [shape: f32[2,4,256], index: 0, kind: input, shape index: {}]
  %s1 = inlined_call_operand.hbm [shape: f32[4,128], index: 1, kind: input, shape index: {}]
  %s2 = inlined_call_operand.vmem [shape: f32[1,128], index: 2, kind: input, shape index: {}]
  %s3 = inlined_call_operand.hbm [shape: f32[2,1,128], index: 3, kind: output, shape index: {}]
  %s4 = sld [smem:[#allocation0]]
  $region61: #{tpu_custom_call.1} parent=0
    _
  %s6 = ssub.s32 1, %s4
  %s7 = scalar_select 0, %s6, %s4
  $region1: #{tpu_custom_call.1} parent=0
    #allocation3 [shape = 'u8[8192]{0}', space=vmem, size = 0x2000, scoped, tag = 'input window, operand 0']
    #allocation4 [shape = 's32[2]{0}', space=sflag, size = 0x8, scoped, tag = 'scoped memory for tpu_custom_call.1']
    #allocation5 [shape = 's32[2]{0}', space=sflag, size = 0x8, scoped, tag = 'scoped memory for tpu_custom_call.1']
    #allocation6 [shape = 'u8[2048]{0}', space=vmem, size = 0x800, scoped, tag = 'input window, operand 1, single buffered']
    #allocation7 [shape = 's32[1]{0}', space=sflag, size = 0x4, scoped, tag = 'scoped memory for tpu_custom_call.1']
    #allocation8 [shape = 'u8[1024]{0}', space=vmem, size = 0x400, scoped, tag = 'output window, operand 0']
    %8 = vsyncpa [#allocation4], 0
    %s9 = scalar_lea.sflag [#allocation4], 1
    %10 = vsyncpa %s9, 0
    %11 = vsyncpa [#allocation7], 0
    %12 = vsyncpa [#allocation5], 0
    %s13 = scalar_lea.sflag [#allocation5], 1
    %14 = vsyncpa %s13, 0
    loop: start=0, step=1, limit=4
    $region2: #{tpu_custom_call.1} parent=1 // loop_pre_header
      _
    $region3: #{tpu_custom_call.1} parent=1 // loop_header
      %s16 = sphi 0, %s20
      %p17 = scmp.ge.s32.totalorder %s16, 4
      %s23 = sphi 0, %s35
      %s24 = sphi 0, %s31
      %s25 = sphi 0, %s23
      %s26 = sphi 0, %s24
      %s27 = sphi 0, %s25
      %s28 = sphi 0, %s26
      %s40 = sphi 0, %s42
      %s43 = sphi 0, %s40
      %s44 = sphi 0, %s43
      %s60 = sphi 0, %s44
      %s64 = sphi 0, %s64
      %s66 = sphi 0, %s64
      %s67 = sphi 0, %s66
      %s81 = sphi 0, %s67
      %s85 = sphi 0, %s85
      %s87 = sphi 0, %s85
      %s88 = sphi 0, %s87
      %s102 = sphi 0, %s88
      %s108 = sphi 0, %s110
      %s111 = sphi 0, %s108
      %s112 = sphi 0, %s111
      %s128 = sphi 0, %s112
    $region4: #{tpu_custom_call.1} parent=1 // loop_header_branch
      %19 = sbr.rel (%p17) target = $region8
    $region5: #{tpu_custom_call.1} parent=1 // loop_body
      %s21 = ssub.s32 %s16, 1
      %s22 = ssub.s32 %s16, 2
      %s29 = sadd.s32 1, %s24
      %p30 = scmp.ge.s32.totalorder %s29, 1
      %s31 = scalar_select %p30, 0, %s29
      %s32 = sadd.s32 1, %s23
      %s33 = scalar_select %p30, %s32, %s23
      %p34 = scmp.ge.s32.totalorder %s33, 2
      %s35 = scalar_select %p34, 0, %s33
      %s36 = ssub.s32 %s23, %s35
      %s37 = ssub.s32 %s24, %s31
      %s38 = sor.u32 %s36, %s37
      %p39 = scmp.eq.s32.totalorder %s38, 0
      %s41 = sadd.s32 %s40, 1
      %s42 = scalar_select %p39, %s40, %s41
      %p45 = pneg %p39
      %p46 = scmp.eq.s32.totalorder %s16, 1
      %p47 = por %p45, %p46
      %p48 = scmp.ne.s32.totalorder %s40, %s43
      %p49 = scmp.eq.s32.totalorder %s16, 0
      %p50 = por %p48, %p49
      %p51 = scmp.ne.s32.totalorder %s40, %s43
      %p52 = scmp.eq.s32.totalorder %s21, 1
      %p53 = por %p51, %p52
      %p54 = scmp.ne.s32.totalorder %s43, %s44
      %p55 = scmp.eq.s32.totalorder %s21, 0
      %p56 = por %p54, %p55
      %p57 = scmp.ne.s32.totalorder %s43, %s44
      %p58 = scmp.eq.s32.totalorder %s22, 1
      %p59 = por %p57, %p58
      %p61 = scmp.ne.s32.totalorder %s44, %s60
      %p62 = scmp.eq.s32.totalorder %s22, 0
      %p63 = por %p61, %p62
      %s65 = sadd.s32 %s64, 1
      %p68 = scmp.eq.s32.totalorder %s16, 1
      %p69 = scmp.ne.s32.totalorder %s64, %s66
      %p70 = scmp.eq.s32.totalorder %s16, 0
      %p71 = por %p69, %p70
      %p72 = scmp.ne.s32.totalorder %s64, %s66
      %p73 = scmp.eq.s32.totalorder %s21, 1
      %p74 = por %p72, %p73
      %p75 = scmp.ne.s32.totalorder %s66, %s67
      %p76 = scmp.eq.s32.totalorder %s21, 0
      %p77 = por %p75, %p76
      %p78 = scmp.ne.s32.totalorder %s66, %s67
      %p79 = scmp.eq.s32.totalorder %s22, 1
      %p80 = por %p78, %p79
      %p82 = scmp.ne.s32.totalorder %s67, %s81
      %p83 = scmp.eq.s32.totalorder %s22, 0
      %p84 = por %p82, %p83
      %s86 = sadd.s32 %s85, 1
      %p89 = scmp.eq.s32.totalorder %s16, 1
      %p90 = scmp.ne.s32.totalorder %s85, %s87
      %p91 = scmp.eq.s32.totalorder %s16, 0
      %p92 = por %p90, %p91
      %p93 = scmp.ne.s32.totalorder %s85, %s87
      %p94 = scmp.eq.s32.totalorder %s21, 1
      %p95 = por %p93, %p94
      %p96 = scmp.ne.s32.totalorder %s87, %s88
      %p97 = scmp.eq.s32.totalorder %s21, 0
      %p98 = por %p96, %p97
      %p99 = scmp.ne.s32.totalorder %s87, %s88
      %p100 = scmp.eq.s32.totalorder %s22, 1
      %p101 = por %p99, %p100
      %p103 = scmp.ne.s32.totalorder %s88, %s102
      %p104 = scmp.eq.s32.totalorder %s22, 0
      %p105 = por %p103, %p104
      %s106 = ssub.s32 %s23, %s35
      %p107 = scmp.eq.s32.totalorder %s106, 0
      %s109 = sadd.s32 %s108, 1
      %s110 = scalar_select %p107, %s108, %s109
      %p113 = pneg %p107
      %p114 = scmp.eq.s32.totalorder %s16, 1
      %p115 = por %p113, %p114
      %p116 = scmp.ne.s32.totalorder %s108, %s111
      %p117 = scmp.eq.s32.totalorder %s16, 0
      %p118 = por %p116, %p117
      %p119 = scmp.ne.s32.totalorder %s108, %s111
      %p120 = scmp.eq.s32.totalorder %s21, 1
      %p121 = por %p119, %p120
      %p122 = scmp.ne.s32.totalorder %s111, %s112
      %p123 = scmp.eq.s32.totalorder %s21, 0
      %p124 = por %p122, %p123
      %p125 = scmp.ne.s32.totalorder %s111, %s112
      %p126 = scmp.eq.s32.totalorder %s22, 1
      %p127 = por %p125, %p126
      %p129 = scmp.ne.s32.totalorder %s112, %s128
      %p130 = scmp.eq.s32.totalorder %s22, 0
      %p131 = por %p129, %p130
      %p132 = scmp.le.s32.totalorder 1, %s16
      %p133 = scmp.lt.s32.totalorder %s16, 3
      %p134 = pnand %p132, %p133
      %p135 = pneg %p134
      // Predicated region
      $region9: #{tpu_custom_call.1} parent=5 // pred_check
        _
      $region10: #{tpu_custom_call.1} parent=5 // pred_check_branch
        %137 = sbr.rel (%p134) target = $region12
      $region11: #{tpu_custom_call.1} parent=5 // pred_region
        %s138 = ssub.s32 %s16, 1
        // Predicated region
        $region13: #{tpu_custom_call.1} parent=11 // pred_check
          %p139 = pneg %p77
        $region14: #{tpu_custom_call.1} parent=11 // pred_check_branch
          %141 = sbr.rel (%p139) target = $region16
        $region15: #{tpu_custom_call.1} parent=11 // pred_region
          %s143 = ssub.s32 64, 64
          %144 = vsyncadd [#allocation7], %s143
          %s146 = sshll.u32 [#allocation6], 4
          %s147 = int_to_ptr.vmem [resolvable:$true] %s146
          %149 = dma.hbm_to_vmem [thread:$0]  %s1, 64, %s147, [#allocation7]
        $region16: #{tpu_custom_call.1} parent=11 // pred_fallthru
          _
        // Predicated region
        $region17: #{tpu_custom_call.1} parent=11 // pred_check
          %p150 = pneg %p98
        $region18: #{tpu_custom_call.1} parent=11 // pred_check_branch
          %152 = sbr.rel (%p150) target = $region20
        $region19: #{tpu_custom_call.1} parent=11 // pred_region
          _
        $region20: #{tpu_custom_call.1} parent=11 // pred_fallthru
          _
      $region12: #{tpu_custom_call.1} parent=5 // pred_fallthru
        _
      %p153 = scmp.lt.s32.totalorder %s16, 2
      // Predicated region
      $region21: #{tpu_custom_call.1} parent=5 // pred_check
        %p154 = pneg %p153
      $region22: #{tpu_custom_call.1} parent=5 // pred_check_branch
        %156 = sbr.rel (%p154) target = $region24
      $region23: #{tpu_custom_call.1} parent=5 // pred_region
        // Predicated region
        $region25: #{tpu_custom_call.1} parent=23 // pred_check
          %p157 = pneg %p50
        $region26: #{tpu_custom_call.1} parent=23 // pred_check_branch
          %159 = sbr.rel (%p157) target = $region28
        $region27: #{tpu_custom_call.1} parent=23 // pred_region
          %s160 = sand.u32 %s40, 1
          %s161 = scalar_lea.sflag [#allocation4], %s160
          %s162 = sand.u32 %s40, 1
          %s163 = smul.addr %s162, 8
          %s164 = scalar_lea.vmem [#allocation3], %s163
          %s165 = smul.u32 2, %s24
          %s167 = ssub.s32 128, 128
          %168 = vsyncadd %s161, %s167
          %s169 = smul.addr %s23, 2
          %s170 = sadd.s32 %s165, %s169
          %s171 = smul.addr %s170, 64
          %s172 = scalar_lea.hbm %s0, %s171
          %s174 = sshll.u32 %s164, 4
          %s175 = int_to_ptr.vmem [resolvable:$true] %s174
          %177 = dma.hbm_to_vmem [thread:$0]  %s172, 128, %s175, %s161
        $region28: #{tpu_custom_call.1} parent=23 // pred_fallthru
          _
      $region24: #{tpu_custom_call.1} parent=5 // pred_fallthru
        _
      %p178 = scmp.le.s32.totalorder 1, %s16
      %p179 = scmp.lt.s32.totalorder %s16, 3
      %p180 = pnand %p178, %p179
      %p181 = pneg %p180
      // Predicated region
      $region29: #{tpu_custom_call.1} parent=5 // pred_check
        _
      $region30: #{tpu_custom_call.1} parent=5 // pred_check_branch
        %183 = sbr.rel (%p180) target = $region32
      $region31: #{tpu_custom_call.1} parent=5 // pred_region
        %s184 = ssub.s32 %s16, 1
        %s185 = sand.u32 %s43, 1
        %s186 = scalar_lea.sflag [#allocation4], %s185
        %s187 = sand.u32 %s43, 1
        %s188 = smul.addr %s187, 8
        %s189 = scalar_lea.vmem [#allocation3], %s188
        // Predicated region
        $region33: #{tpu_custom_call.1} parent=31 // pred_check
          %p190 = pneg %p56
        $region34: #{tpu_custom_call.1} parent=31 // pred_check_branch
          %192 = sbr.rel (%p190) target = $region36
        $region35: #{tpu_custom_call.1} parent=31 // pred_region
          %193 = dma.done %s186, 128
        $region36: #{tpu_custom_call.1} parent=31 // pred_fallthru
          _
        // Predicated region
        $region37: #{tpu_custom_call.1} parent=31 // pred_check
          %p194 = pneg %p77
        $region38: #{tpu_custom_call.1} parent=31 // pred_check_branch
          %196 = sbr.rel (%p194) target = $region40
        $region39: #{tpu_custom_call.1} parent=31 // pred_region
          %197 = dma.done [#allocation7], 64
        $region40: #{tpu_custom_call.1} parent=31 // pred_fallthru
          _
        %s198 = sand.u32 %s43, 1
        %s199 = scalar_lea.sflag [#allocation4], %s198
        %s200 = sand.u32 %s43, 1
        %s201 = smul.addr %s200, 8
        %s202 = scalar_lea.vmem [#allocation3], %s201
        %p203 = pneg %p56
        %p204 = pneg %p53
        %p205 = pneg %p77
        %p206 = pneg %p74
        %p207 = pneg %p98
        %p208 = pneg %p95
        %p209 = pneg %p124
        %p210 = pneg %p121
        %s211 = sand.u32 %s111, 1
        %s212 = scalar_lea.sflag [#allocation5], %s211
        %s213 = sand.u32 %s111, 1
        %s214 = scalar_lea.vmem [#allocation8], %s213
        %s215 = smul.u32 2, %s26
        %p216 = scmp.eq.s32.totalorder %s26, 0
        // Predicated region
        $region41: #{tpu_custom_call.1} parent=31 // pred_check
          %p217 = pneg %p216
        $region42: #{tpu_custom_call.1} parent=31 // pred_check_branch
          %219 = sbr.rel (%p217) target = $region44
        $region43: #{tpu_custom_call.1} parent=31 // pred_region
          %220 = vst [vmem:[#allocation2] sm:$0xf] 0.0
        $region44: #{tpu_custom_call.1} parent=31 // pred_fallthru
          _
        %v221 = vld [vmem:[%s189] sm:$0xff]
        %v223 = vrot.slane %v221, 4
        %v225 = vadd.f32 %v221, %v223
        %v226 = vld [vmem:[#allocation2] sm:$0xf]
        %v227 = vadd.f32 %v226, %v225
        %228 = vst [vmem:[#allocation2] sm:$0xf] %v227
        // Predicated region
        $region45: #{tpu_custom_call.1} parent=31 // pred_check
          %p229 = pneg %p216
        $region46: #{tpu_custom_call.1} parent=31 // pred_check_branch
          %231 = sbr.rel (%p229) target = $region48
        $region47: #{tpu_custom_call.1} parent=31 // pred_region
          %v232 = vld [vmem:[#allocation2] sm:$0xf]
          %vm233 = vcmask 1043456
          %v234 = vsel %vm233, %v232, 0.0
          %235 = vadd.xlane.f32.xlu0 %v234
          %v236 = vpop.xlane.xlu0 %235
          %v237 = vmul.f32 %v236, 0.00390625
          %v238 = vld [vmem:[#allocation6] sm:$0xf]
          %v239 = vld [vmem:[%s2] sm:$0x1]
          %v241 = vlaneseq
          %v242 = vand.u32 %v241, 127
          %v243 = vlaneseq
          %v244 = vshrl.u32 %v243, 7
          %v245 = vsub.s32 %v242, %v244
          %v246 = vrot.slane %v237, %v245
          %vm247 = vcmask 31744
          %v248 = vsel %vm247, %v246, 0
          %v251 = vsel %vm233, %v238, 0
          %253 = vmatprep.subr.mxu0 0.0
          %254 = vmatpush1.msra.mxu0 0.0
          %255 = vmatprep.subr.mxu0 0.0
          %256 = vmatpush1.msra.mxu0 0.0
          %257 = vmatprep.subr.mxu0 0.0
          %258 = vmatpush1.msra.mxu0 0.0
          %259 = vmatprep.subr.mxu0 0.0
          %260 = vmatpush1.msra.mxu0 0.0
          %261 = vmatprep.subr.mxu0 0.0
          %262 = vmatpush1.msra.mxu0 0.0
          %263 = vmatprep.subr.mxu0 0.0
          %264 = vmatpush1.msra.mxu0 0.0
          %265 = vmatprep.subr.mxu0 0.0
          %266 = vmatpush1.msra.mxu0 0.0
          %267 = vmatprep.subr.mxu0 0.0
          %268 = vmatpush1.msra.mxu0 0.0
          %269 = vmatprep.subr.mxu0 0.0
          %270 = vmatpush1.msra.mxu0 0.0
          %271 = vmatprep.subr.mxu0 0.0
          %272 = vmatpush1.msra.mxu0 0.0
          %273 = vmatprep.subr.mxu0 0.0
          %274 = vmatpush1.msra.mxu0 0.0
          %275 = vmatprep.subr.mxu0 0.0
          %276 = vmatpush1.msra.mxu0 0.0
          %277 = vmatprep.subr.mxu0 0.0
          %278 = vmatpush1.msra.mxu0 0.0
          %279 = vmatprep.subr.mxu0 0.0
          %280 = vmatpush1.msra.mxu0 0.0
          %281 = vmatprep.subr.mxu0 0.0
          %282 = vmatpush1.msra.mxu0 0.0
          %283 = vmatprep.subr.mxu0 0.0
          %284 = vmatpush1.msra.mxu0 %v251
          %285 = vmatprep.subr.mxu0 0.0
          %286 = vmatpush2.msra.mxu0 0.0
          %287 = vmatprep.subr.mxu0 0.0
          %288 = vmatpush2.msra.mxu0 0.0
          %289 = vmatprep.subr.mxu0 0.0
          %290 = vmatpush2.msra.mxu0 0.0
          %291 = vmatprep.subr.mxu0 0.0
          %292 = vmatpush2.msra.mxu0 0.0
          %293 = vmatprep.subr.mxu0 0.0
          %294 = vmatpush2.msra.mxu0 0.0
          %295 = vmatprep.subr.mxu0 0.0
          %296 = vmatpush2.msra.mxu0 0.0
          %297 = vmatprep.subr.mxu0 0.0
          %298 = vmatpush2.msra.mxu0 0.0
          %299 = vmatprep.subr.mxu0 0.0
          %300 = vmatpush2.msra.mxu0 0.0
          %301 = vmatprep.subr.mxu0 0.0
          %302 = vmatpush2.msra.mxu0 0.0
          %303 = vmatprep.subr.mxu0 0.0
          %304 = vmatpush2.msra.mxu0 0.0
          %305 = vmatprep.subr.mxu0 0.0
          %306 = vmatpush2.msra.mxu0 0.0
          %307 = vmatprep.subr.mxu0 0.0
          %308 = vmatpush2.msra.mxu0 0.0
          %309 = vmatprep.subr.mxu0 0.0
          %310 = vmatpush2.msra.mxu0 0.0
          %311 = vmatprep.subr.mxu0 0.0
          %312 = vmatpush2.msra.mxu0 0.0
          %313 = vmatprep.subr.mxu0 0.0
          %314 = vmatpush2.msra.mxu0 0.0
          %315 = vmatprep.subr.mxu0 0.0
          %316 = vmatpush2.msra.mxu0 0.0
          %317 = vmatprep.mubr.f32.mxu0 0.0
          %318 = vmatmul.mubr.f32.gmra.mxu0 %v248
          %v319 = vpop.f32.mrf.mxu0
          %v320 = vadd.f32 %v239, %v319
          %v321 = vpop.f32.mrf.mxu0
          %322 = vdwg.mxu0
          %323 = vst [vmem:[%s214] sm:$0x1] %v320
        $region48: #{tpu_custom_call.1} parent=31 // pred_fallthru
          _
        %s324 = sand.u32 %s111, 1
        %s325 = scalar_lea.sflag [#allocation5], %s324
        %s326 = sand.u32 %s111, 1
        %s327 = scalar_lea.vmem [#allocation8], %s326
        // Predicated region
        $region49: #{tpu_custom_call.1} parent=31 // pred_check
          %p328 = pneg %p121
        $region50: #{tpu_custom_call.1} parent=31 // pred_check_branch
          %330 = sbr.rel (%p328) target = $region52
        $region51: #{tpu_custom_call.1} parent=31 // pred_region
          %s332 = ssub.s32 16, 16
          %333 = vsyncadd %s325, %s332
          %s334 = smul.addr %s25, 16
          %s335 = scalar_lea.hbm %s3, %s334
          %s337 = sshll.u32 %s327, 4
          %s338 = int_to_ptr.vmem [resolvable:$true] %s337
          %340 = dma.vmem_to_hbm [thread:$0]  %s338, 16, %s335, %s325
        $region52: #{tpu_custom_call.1} parent=31 // pred_fallthru
          _
      $region32: #{tpu_custom_call.1} parent=5 // pred_fallthru
        _
      %p341 = scmp.le.s32.totalorder 2, %s16
      // Predicated region
      $region53: #{tpu_custom_call.1} parent=5 // pred_check
        %p342 = pneg %p341
      $region54: #{tpu_custom_call.1} parent=5 // pred_check_branch
        %344 = sbr.rel (%p342) target = $region56
      $region55: #{tpu_custom_call.1} parent=5 // pred_region
        %s345 = ssub.s32 %s16, 2
        // Predicated region
        $region57: #{tpu_custom_call.1} parent=55 // pred_check
          %p346 = pneg %p127
        $region58: #{tpu_custom_call.1} parent=55 // pred_check_branch
          %348 = sbr.rel (%p346) target = $region60
        $region59: #{tpu_custom_call.1} parent=55 // pred_region
          %s349 = sand.u32 %s112, 1
          %s350 = scalar_lea.sflag [#allocation5], %s349
          %s351 = sand.u32 %s112, 1
          %s352 = scalar_lea.vmem [#allocation8], %s351
          %353 = dma.done %s350, 16
        $region60: #{tpu_custom_call.1} parent=55 // pred_fallthru
          _
      $region56: #{tpu_custom_call.1} parent=5 // pred_fallthru
        _
    $region6: #{tpu_custom_call.1} parent=1 // loop_footer
      %s20 = sadd.s32 1, %s16
    $region7: #{tpu_custom_call.1} parent=1 // loop_footer_branch
      %15 = sbr.rel target = $region3
    $region8: #{tpu_custom_call.1} parent=1 // loop_exit
      _
    %354 = vsyncpa [#allocation4], 1
    %s355 = scalar_lea.sflag [#allocation4], 1
    %356 = vsyncpa %s355, 1
    %357 = vsyncpa [#allocation7], 1
    %358 = vsyncpa [#allocation5], 1
    %s359 = scalar_lea.sflag [#allocation5], 1
    %360 = vsyncpa %s359, 1

</llo_original>
